<compile_context>
chip_gen: v7x
topology: tpu7x:2x2x1
jax: 0.10.0
libtpu: 0.0.40
codegen_flags: <defaults>
</compile_context>

<pallas_src>
import functools

import jax
import jax.numpy as jnp
from jax.experimental import pallas as pl
from jax.experimental.pallas import tpu as pltpu

IGNORE_LB = 255
MAX_TILE_PIX = 65536  # upper bound on pixels (lanes) per grid step


def _normal_loss_kernel(logits_ref, labels_ref, out_ref, *, hw, tile_pix,
                        has_overhang):
    x = logits_ref[0].astype(jnp.float32)      # (C, T): classes on sublanes
    lab = labels_ref[0].astype(jnp.int32)      # (1, T): upcast in-register

    valid = lab != IGNORE_LB                   # (1, T)
    if has_overhang:
        # Emitted only when HW % tile_pix != 0 (static); interior blocks see
        # limit >= tile_pix so the compare is all-true there.
        j = pl.program_id(1)
        limit = hw - j * tile_pix
        lane = jax.lax.broadcasted_iota(jnp.int32, (1, tile_pix), 1)
        valid = valid & (lane < limit)

    # Numerically stable logsumexp over the class (sublane) axis.
    m = jnp.max(x, axis=0, keepdims=True)                              # (1, T)
    lse = m + jnp.log(jnp.sum(jnp.exp(x - m), axis=0, keepdims=True))  # (1, T)
    # TODO(synk): on v7x (EUP-bound) consider computing jnp.exp(x - m) in bf16
    #             (x - m <= 0, so exp in [0, 1]); keep the sum/log in f32.

    # Gather logits[label[p], p] via one-hot compare against a (C, 1) class
    # iota (no (C, T) iota materialized per step).
    cls = jax.lax.broadcasted_iota(jnp.int32, (x.shape[0], 1), 0)      # (C, 1)
    picked = jnp.sum(jnp.where(cls == lab, x, 0.0), axis=0, keepdims=True)

    # Per-pixel loss; ignored / overhang / >C-label-aliased pixels contribute 0
    # (NaN/inf from unspecified overhang data is masked out by the select).
    loss = jnp.where(valid, lse - picked, 0.0)                         # (1, T)

    # Per-block partial sum, broadcast across the 128-lane output block so the
    # store is lane-dense; wrapper reads lane 0 of every block.
    s = jnp.sum(loss)
    out_ref[...] = jnp.broadcast_to(s, out_ref.shape)


def normal_loss(logits, labels, *, max_tile_pix=MAX_TILE_PIX):
    """logits: (N, C, H, W) float32/bfloat16; labels: (N, H, W) int in [0,C) or 255.

    Returns CrossEntropyLoss(ignore_index=255, reduction='none')(logits, labels).mean(),
    i.e. the divisor is N*H*W including ignored pixels (torch.mean semantics of
    the 'none'-reduced loss map — NOT reduction='mean' with ignore_index).
    """
    N, C, H, W = logits.shape
    HW = H * W

    # Free reshapes only (no transpose): classes stay on the sublane axis,
    # pixels become the 128-wide lane axis.
    logits3d = logits.reshape(N, C, HW)
    if not jnp.issubdtype(labels.dtype, jnp.integer):
        labels = labels.astype(jnp.int32)
    labels3d = labels.reshape(N, 1, HW)   # keep narrow int dtypes; upcast in-kernel

    # ---- adaptive tile sizing (per-generation VMEM, intermediates counted) ----
    try:
        vmem_cap = int(pltpu.get_tpu_info().vmem_capacity_bytes)
    except Exception:
        vmem_cap = 64 * 1024 * 1024   # conservative fallback (v7x per-TC physical)
    lg_isz = jnp.dtype(logits3d.dtype).itemsize
    lb_isz = jnp.dtype(labels3d.dtype).itemsize
    # Per-pixel VMEM bytes of one grid step:
    #   double-buffered logits block, ~7 (C,T) f32 elementwise temporaries,
    #   double-buffered labels block, plus (1,T) row vectors (m, lse, valid,
    #   loss, iota, upcast labels) counted at full-vreg footprint.
    per_pix = 2 * C * lg_isz + 28 * C + 2 * lb_isz + 192
    budget = int(vmem_cap * 0.40)     # leave >half of VMEM for compiler scratch
    cap = max(128, min(max_tile_pix, (budget // per_pix) // 128 * 128))
    tile_pix = HW if HW <= cap else cap
    num_j = pl.cdiv(HW, tile_pix)
    has_overhang = (HW % tile_pix) != 0

    # Computed requirement + headroom, never the full physical VMEM (v7x!).
    vmem_limit = min(int(vmem_cap * 0.85),
                     max(32 * 1024 * 1024, per_pix * tile_pix + (8 << 20)))

    kernel = functools.partial(_normal_loss_kernel, hw=HW, tile_pix=tile_pix,
                               has_overhang=has_overhang)

    partials = pl.pallas_call(
        kernel,
        out_shape=jax.ShapeDtypeStruct((N, num_j, 1, 128), jnp.float32),
        grid_spec=pltpu.PrefetchScalarGridSpec(
            num_scalar_prefetch=0,
            grid=(N, num_j),
            in_specs=[
                # TODO(synk): if DMA is still exposed at these tile sizes, add
                #             pipeline_mode=pl.Buffered(3) to the logits spec.
                pl.BlockSpec((1, C, tile_pix), lambda n, j: (n, 0, j)),
                pl.BlockSpec((1, 1, tile_pix), lambda n, j: (n, 0, j)),
            ],
            out_specs=pl.BlockSpec((1, 1, 1, 128), lambda n, j: (n, j, 0, 0)),
        ),
        compiler_params=pltpu.CompilerParams(
            # Every grid step writes its own partial-sum block: no carried
            # state, so both axes shard across TensorCores on v7x megacore
            # (measured-neutral on single-TC v5e/v6e).
            dimension_semantics=("parallel", "parallel"),
            vmem_limit_bytes=vmem_limit,
        ),
    )(logits3d, labels3d)

    # Tiny final reduce + divide in JAX (every lane of a block holds the same
    # partial sum, so read lane 0 of each block).
    return jnp.sum(partials[:, :, 0, 0]) / jnp.float32(N * HW)


def _reference(logits, labels):
    # pure-JAX reference of CrossEntropyLoss(ignore_index=255, reduction='none').mean()
    N, C, H, W = logits.shape
    x = jnp.transpose(logits, (0, 2, 3, 1)).reshape(-1, C).astype(jnp.float32)
    lab = labels.reshape(-1).astype(jnp.int32)
    lse = jax.nn.logsumexp(x, axis=-1)
    safe_lab = jnp.where(lab == IGNORE_LB, 0, lab)
    picked = jnp.take_along_axis(x, safe_lab[:, None], axis=-1)[:, 0]
    loss = jnp.where(lab == IGNORE_LB, 0.0, lse - picked)
    return jnp.mean(loss)


if __name__ == "__main__":
    key = jax.random.PRNGKey(0)

    # --- Test 1: small, tile == full HW (single j block) ---
    k1, k2, k3, key = jax.random.split(key, 4)
    N, C, H, W = 2, 4, 16, 16
    logits = jax.random.normal(k1, (N, C, H, W), dtype=jnp.float32)
    labels = jax.random.randint(k2, (N, H, W), 0, C, dtype=jnp.int32)
    ignore_mask = jax.random.uniform(k3, (N, H, W)) < 0.1
    labels = jnp.where(ignore_mask, IGNORE_LB, labels)

    loss = normal_loss(logits, labels)
    jax.block_until_ready(loss)
    ref = _reference(logits, labels)
    assert jnp.allclose(loss, ref, rtol=1e-5, atol=1e-5), (loss, ref)

    # --- Test 2: ragged HW (HW % tile_pix != 0) with multiple j blocks ---
    k1, k2, k3, key = jax.random.split(key, 4)
    N2, C2, H2, W2 = 1, 4, 20, 20          # HW = 400 -> blocks of 128 + overhang
    logits2 = jax.random.normal(k1, (N2, C2, H2, W2), dtype=jnp.float32)
    labels2 = jax.random.randint(k2, (N2, H2, W2), 0, C2, dtype=jnp.int32)
    ignore_mask2 = jax.random.uniform(k3, (N2, H2, W2)) < 0.1
    labels2 = jnp.where(ignore_mask2, IGNORE_LB, labels2)

    loss2 = normal_loss(logits2, labels2, max_tile_pix=128)
    jax.block_until_ready(loss2)
    ref2 = _reference(logits2, labels2)
    assert jnp.allclose(loss2, ref2, rtol=1e-5, atol=1e-5), (loss2, ref2)

    print("KERNEL_OK")
</pallas_src>

<mosaic_0001>
module attributes {stable_mosaic.version = 11 : i64} {
  func.func @_normal_loss_kernel(%arg0: i32, %arg1: i32, %arg2: memref<1x4x256xf32, #tpu.memory_space<vmem>>, %arg3: memref<1x1x256xi32, #tpu.memory_space<vmem>>, %arg4: memref<1x1x1x128xf32, #tpu.memory_space<vmem>>) attributes {dimension_semantics = [#tpu.dimension_semantics<parallel>, #tpu.dimension_semantics<parallel>], iteration_bounds = array<i64: 2, 1>, scalar_prefetch = 0 : i64, scratch_operands = 0 : i64, tpu.core_type = #tpu.core_type<tc>, window_params = [{transform_indices = @transform_0, window_bounds = array<i64: 1, 4, 256>}, {transform_indices = @transform_1, window_bounds = array<i64: 1, 1, 256>}, {transform_indices = @transform_2, window_bounds = array<i64: 1, 1, 1, 128>}]} {
    %c0 = arith.constant 0 : index
    %c0_0 = arith.constant 0 : index
    %c0_1 = arith.constant 0 : index
    %0 = vector.load %arg2[%c0, %c0_0, %c0_1] : memref<1x4x256xf32, #tpu.memory_space<vmem>>, vector<1x4x256xf32>
    %1 = vector.shape_cast %0 : vector<1x4x256xf32> to vector<4x256xf32>
    %c0_2 = arith.constant 0 : index
    %c0_3 = arith.constant 0 : index
    %c0_4 = arith.constant 0 : index
    %2 = vector.load %arg3[%c0_2, %c0_3, %c0_4] : memref<1x1x256xi32, #tpu.memory_space<vmem>>, vector<1x1x256xi32>
    %3 = vector.shape_cast %2 : vector<1x1x256xi32> to vector<1x256xi32>
    %c255_i32 = arith.constant 255 : i32
    %4 = vector.broadcast %c255_i32 : i32 to vector<1x256xi32>
    %5 = arith.cmpi ne, %3, %4 : vector<1x256xi32>
    %cst = arith.constant dense<0xFF800000> : vector<256xf32>
    %6 = vector.multi_reduction <maximumf>, %1, %cst [0] : vector<4x256xf32> to vector<256xf32>
    %7 = vector.shape_cast %6 : vector<256xf32> to vector<1x256xf32>
    %8 = vector.broadcast %7 : vector<1x256xf32> to vector<4x256xf32>
    %9 = arith.subf %1, %8 : vector<4x256xf32>
    %10 = math.exp %9 : vector<4x256xf32>
    %cst_5 = arith.constant dense<0.000000e+00> : vector<256xf32>
    %11 = vector.multi_reduction <add>, %10, %cst_5 [0] : vector<4x256xf32> to vector<256xf32>
    %12 = vector.shape_cast %11 : vector<256xf32> to vector<1x256xf32>
    %13 = math.log %12 : vector<1x256xf32>
    %14 = arith.addf %7, %13 : vector<1x256xf32>
    %15 = tpu.iota {dimensions = array<i32: 0>} : vector<4x1xi32>
    %16 = vector.broadcast %15 : vector<4x1xi32> to vector<4x256xi32>
    %17 = vector.broadcast %3 : vector<1x256xi32> to vector<4x256xi32>
    %18 = arith.cmpi eq, %16, %17 : vector<4x256xi32>
    %cst_6 = arith.constant 0.000000e+00 : f32
    %19 = vector.broadcast %cst_6 : f32 to vector<4x256xf32>
    %20 = arith.select %18, %1, %19 : vector<4x256xi1>, vector<4x256xf32>
    %cst_7 = arith.constant dense<0.000000e+00> : vector<256xf32>
    %21 = vector.multi_reduction <add>, %20, %cst_7 [0] : vector<4x256xf32> to vector<256xf32>
    %22 = vector.shape_cast %21 : vector<256xf32> to vector<1x256xf32>
    %23 = arith.subf %14, %22 : vector<1x256xf32>
    %cst_8 = arith.constant 0.000000e+00 : f32
    %24 = vector.broadcast %cst_8 : f32 to vector<1x256xf32>
    %25 = arith.select %5, %23, %24 : vector<1x256xi1>, vector<1x256xf32>
    %26 = vector.shape_cast %25 : vector<1x256xf32> to vector<1x1x256xf32>
    %cst_9 = arith.constant dense<0.000000e+00> : vector<1xf32>
    %27 = vector.multi_reduction <add>, %26, %cst_9 [1, 2] : vector<1x1x256xf32> to vector<1xf32>
    %28 = vector.shape_cast %27 : vector<1xf32> to vector<1x1x1xf32>
    %29 = vector.extract %28[0, 0, 0] : f32 from vector<1x1x1xf32>
    %30 = vector.broadcast %29 : f32 to vector<1x1x1x128xf32>
    %c0_10 = arith.constant 0 : index
    %c0_11 = arith.constant 0 : index
    %c0_12 = arith.constant 0 : index
    %c0_13 = arith.constant 0 : index
    %31 = vector.load %arg4[%c0_10, %c0_11, %c0_12, %c0_13] : memref<1x1x1x128xf32, #tpu.memory_space<vmem>>, vector<1x1x1x128xf32>
    tpu.vector_store %arg4[%c0_10, %c0_11, %c0_12, %c0_13], %30 {strides = array<i32>} : memref<1x1x1x128xf32, #tpu.memory_space<vmem>>, vector<1x1x1x128xf32>,
    return
  }
  func.func @transform_0(%arg0: i32, %arg1: i32) -> (i32, i32, i32) {
    %c0_i32 = arith.constant 0 : i32
    %c0_i32_0 = arith.constant 0 : i32
    return %arg0, %c0_i32, %arg1 : i32, i32, i32
  }
  func.func @transform_1(%arg0: i32, %arg1: i32) -> (i32, i32, i32) {
    %c0_i32 = arith.constant 0 : i32
    %c0_i32_0 = arith.constant 0 : i32
    return %arg0, %c0_i32, %arg1 : i32, i32, i32
  }
  func.func @transform_2(%arg0: i32, %arg1: i32) -> (i32, i32, i32, i32) {
    %c0_i32 = arith.constant 0 : i32
    %c0_i32_0 = arith.constant 0 : i32
    %c0_i32_1 = arith.constant 0 : i32
    return %arg0, %arg1, %c0_i32, %c0_i32_0 : i32, i32, i32, i32
  }
}

</mosaic_0001>

<llo_original>
// kernel: tpu_custom_call.1
$region0: #{tpu_custom_call.1}
  #allocation0 [shape = 'u32[]', space=smem, size = 0x4, offset = 0x4, fixed_abs, tag = 'smem constant byte address 0x4 - core index']
  #allocation1 [shape = 'u32[144,128]{1,0:T(1,128)}', space=vmem, size = 0x12000, scoped, tag = 'internal scratch']
  %s0 = inlined_call_operand.hbm [shape: f32[2,4,256], index: 0, kind: input, shape index: {}]
  %s1 = inlined_call_operand.hbm [shape: s32[2,1,256], index: 1, kind: input, shape index: {}]
  %s2 = inlined_call_operand.hbm [shape: f32[2,1,1,128], index: 2, kind: output, shape index: {}]
  %s3 = sld [smem:[#allocation0]]
  $region49: #{tpu_custom_call.1} parent=0
    _
  %s5 = ssub.s32 1, %s3
  %s6 = scalar_select 0, %s5, %s3
  $region1: #{tpu_custom_call.1} parent=0
    #allocation2 [shape = 'u8[8192]{0}', space=vmem, size = 0x2000, scoped, tag = 'input window, operand 0']
    #allocation3 [shape = 's32[2]{0}', space=sflag, size = 0x8, scoped, tag = 'scoped memory for tpu_custom_call.1']
    #allocation4 [shape = 's32[2]{0}', space=sflag, size = 0x8, scoped, tag = 'scoped memory for tpu_custom_call.1']
    #allocation5 [shape = 'u8[2048]{0}', space=vmem, size = 0x800, scoped, tag = 'input window, operand 1']
    #allocation6 [shape = 's32[2]{0}', space=sflag, size = 0x8, scoped, tag = 'scoped memory for tpu_custom_call.1']
    #allocation7 [shape = 'u8[1024]{0}', space=vmem, size = 0x400, scoped, tag = 'output window, operand 0']
    %7 = vsyncpa [#allocation3], 0
    %s8 = scalar_lea.sflag [#allocation3], 1
    %9 = vsyncpa %s8, 0
    %10 = vsyncpa [#allocation6], 0
    %s11 = scalar_lea.sflag [#allocation6], 1
    %12 = vsyncpa %s11, 0
    %13 = vsyncpa [#allocation4], 0
    %s14 = scalar_lea.sflag [#allocation4], 1
    %15 = vsyncpa %s14, 0
    loop: start=0, step=1, limit=4
    $region2: #{tpu_custom_call.1} parent=1 // loop_pre_header
      _
    $region3: #{tpu_custom_call.1} parent=1 // loop_header
      %s17 = sphi 0, %s21
      %p18 = scmp.ge.s32.totalorder %s17, 4
      %s24 = sphi 0, %s36
      %s25 = sphi 0, %s32
      %s26 = sphi 0, %s24
      %s27 = sphi 0, %s25
      %s28 = sphi 0, %s26
      %s29 = sphi 0, %s27
      %s41 = sphi 0, %s43
      %s44 = sphi 0, %s41
      %s45 = sphi 0, %s44
      %s61 = sphi 0, %s45
      %s69 = sphi 0, %s71
      %s72 = sphi 0, %s69
      %s73 = sphi 0, %s72
      %s89 = sphi 0, %s73
      %s97 = sphi 0, %s99
      %s100 = sphi 0, %s97
      %s101 = sphi 0, %s100
      %s117 = sphi 0, %s101
    $region4: #{tpu_custom_call.1} parent=1 // loop_header_branch
      %20 = sbr.rel (%p18) target = $region8
    $region5: #{tpu_custom_call.1} parent=1 // loop_body
      %s22 = ssub.s32 %s17, 1
      %s23 = ssub.s32 %s17, 2
      %s30 = sadd.s32 1, %s25
      %p31 = scmp.ge.s32.totalorder %s30, 1
      %s32 = scalar_select %p31, 0, %s30
      %s33 = sadd.s32 1, %s24
      %s34 = scalar_select %p31, %s33, %s24
      %p35 = scmp.ge.s32.totalorder %s34, 2
      %s36 = scalar_select %p35, 0, %s34
      %s37 = ssub.s32 %s24, %s36
      %s38 = ssub.s32 %s25, %s32
      %s39 = sor.u32 %s37, %s38
      %p40 = scmp.eq.s32.totalorder %s39, 0
      %s42 = sadd.s32 %s41, 1
      %s43 = scalar_select %p40, %s41, %s42
      %p46 = pneg %p40
      %p47 = scmp.eq.s32.totalorder %s17, 1
      %p48 = por %p46, %p47
      %p49 = scmp.ne.s32.totalorder %s41, %s44
      %p50 = scmp.eq.s32.totalorder %s17, 0
      %p51 = por %p49, %p50
      %p52 = scmp.ne.s32.totalorder %s41, %s44
      %p53 = scmp.eq.s32.totalorder %s22, 1
      %p54 = por %p52, %p53
      %p55 = scmp.ne.s32.totalorder %s44, %s45
      %p56 = scmp.eq.s32.totalorder %s22, 0
      %p57 = por %p55, %p56
      %p58 = scmp.ne.s32.totalorder %s44, %s45
      %p59 = scmp.eq.s32.totalorder %s23, 1
      %p60 = por %p58, %p59
      %p62 = scmp.ne.s32.totalorder %s45, %s61
      %p63 = scmp.eq.s32.totalorder %s23, 0
      %p64 = por %p62, %p63
      %s65 = ssub.s32 %s24, %s36
      %s66 = ssub.s32 %s25, %s32
      %s67 = sor.u32 %s65, %s66
      %p68 = scmp.eq.s32.totalorder %s67, 0
      %s70 = sadd.s32 %s69, 1
      %s71 = scalar_select %p68, %s69, %s70
      %p74 = pneg %p68
      %p75 = scmp.eq.s32.totalorder %s17, 1
      %p76 = por %p74, %p75
      %p77 = scmp.ne.s32.totalorder %s69, %s72
      %p78 = scmp.eq.s32.totalorder %s17, 0
      %p79 = por %p77, %p78
      %p80 = scmp.ne.s32.totalorder %s69, %s72
      %p81 = scmp.eq.s32.totalorder %s22, 1
      %p82 = por %p80, %p81
      %p83 = scmp.ne.s32.totalorder %s72, %s73
      %p84 = scmp.eq.s32.totalorder %s22, 0
      %p85 = por %p83, %p84
      %p86 = scmp.ne.s32.totalorder %s72, %s73
      %p87 = scmp.eq.s32.totalorder %s23, 1
      %p88 = por %p86, %p87
      %p90 = scmp.ne.s32.totalorder %s73, %s89
      %p91 = scmp.eq.s32.totalorder %s23, 0
      %p92 = por %p90, %p91
      %s93 = ssub.s32 %s24, %s36
      %s94 = ssub.s32 %s25, %s32
      %s95 = sor.u32 %s93, %s94
      %p96 = scmp.eq.s32.totalorder %s95, 0
      %s98 = sadd.s32 %s97, 1
      %s99 = scalar_select %p96, %s97, %s98
      %p102 = pneg %p96
      %p103 = scmp.eq.s32.totalorder %s17, 1
      %p104 = por %p102, %p103
      %p105 = scmp.ne.s32.totalorder %s97, %s100
      %p106 = scmp.eq.s32.totalorder %s17, 0
      %p107 = por %p105, %p106
      %p108 = scmp.ne.s32.totalorder %s97, %s100
      %p109 = scmp.eq.s32.totalorder %s22, 1
      %p110 = por %p108, %p109
      %p111 = scmp.ne.s32.totalorder %s100, %s101
      %p112 = scmp.eq.s32.totalorder %s22, 0
      %p113 = por %p111, %p112
      %p114 = scmp.ne.s32.totalorder %s100, %s101
      %p115 = scmp.eq.s32.totalorder %s23, 1
      %p116 = por %p114, %p115
      %p118 = scmp.ne.s32.totalorder %s101, %s117
      %p119 = scmp.eq.s32.totalorder %s23, 0
      %p120 = por %p118, %p119
      %p121 = scmp.le.s32.totalorder 1, %s17
      %p122 = scmp.lt.s32.totalorder %s17, 3
      %p123 = pnand %p121, %p122
      %p124 = pneg %p123
      // Predicated region
      $region9: #{tpu_custom_call.1} parent=5 // pred_check
        _
      $region10: #{tpu_custom_call.1} parent=5 // pred_check_branch
        %126 = sbr.rel (%p123) target = $region12
      $region11: #{tpu_custom_call.1} parent=5 // pred_region
        %s127 = ssub.s32 %s17, 1
      $region12: #{tpu_custom_call.1} parent=5 // pred_fallthru
        _
      %p128 = scmp.lt.s32.totalorder %s17, 2
      // Predicated region
      $region13: #{tpu_custom_call.1} parent=5 // pred_check
        %p129 = pneg %p128
      $region14: #{tpu_custom_call.1} parent=5 // pred_check_branch
        %131 = sbr.rel (%p129) target = $region16
      $region15: #{tpu_custom_call.1} parent=5 // pred_region
        // Predicated region
        $region17: #{tpu_custom_call.1} parent=15 // pred_check
          %p132 = pneg %p51
        $region18: #{tpu_custom_call.1} parent=15 // pred_check_branch
          %134 = sbr.rel (%p132) target = $region20
        $region19: #{tpu_custom_call.1} parent=15 // pred_region
          %s135 = sand.u32 %s41, 1
          %s136 = scalar_lea.sflag [#allocation3], %s135
          %s137 = sand.u32 %s41, 1
          %s138 = smul.addr %s137, 8
          %s139 = scalar_lea.vmem [#allocation2], %s138
          %s140 = smul.u32 2, %s25
          %s142 = ssub.s32 128, 128
          %143 = vsyncadd %s136, %s142
          %s144 = smul.addr %s24, 2
          %s145 = sadd.s32 %s140, %s144
          %s146 = smul.addr %s145, 64
          %s147 = scalar_lea.hbm %s0, %s146
          %s149 = sshll.u32 %s139, 4
          %s150 = int_to_ptr.vmem [resolvable:$true] %s149
          %152 = dma.hbm_to_vmem [thread:$0]  %s147, 128, %s150, %s136
        $region20: #{tpu_custom_call.1} parent=15 // pred_fallthru
          _
        // Predicated region
        $region21: #{tpu_custom_call.1} parent=15 // pred_check
          %p153 = pneg %p79
        $region22: #{tpu_custom_call.1} parent=15 // pred_check_branch
          %155 = sbr.rel (%p153) target = $region24
        $region23: #{tpu_custom_call.1} parent=15 // pred_region
          %s156 = sand.u32 %s69, 1
          %s157 = scalar_lea.sflag [#allocation6], %s156
          %s158 = sand.u32 %s69, 1
          %s159 = smul.addr %s158, 2
          %s160 = scalar_lea.vmem [#allocation5], %s159
          %s161 = smul.u32 2, %s25
          %s163 = ssub.s32 32, 32
          %164 = vsyncadd %s157, %s163
          %s165 = smul.addr %s24, 2
          %s166 = sadd.s32 %s161, %s165
          %s167 = smul.addr %s166, 16
          %s168 = scalar_lea.hbm %s1, %s167
          %s170 = sshll.u32 %s160, 4
          %s171 = int_to_ptr.vmem [resolvable:$true] %s170
          %173 = dma.hbm_to_vmem [thread:$0]  %s168, 32, %s171, %s157
        $region24: #{tpu_custom_call.1} parent=15 // pred_fallthru
          _
      $region16: #{tpu_custom_call.1} parent=5 // pred_fallthru
        _
      %p174 = scmp.le.s32.totalorder 1, %s17
      %p175 = scmp.lt.s32.totalorder %s17, 3
      %p176 = pnand %p174, %p175
      %p177 = pneg %p176
      // Predicated region
      $region25: #{tpu_custom_call.1} parent=5 // pred_check
        _
      $region26: #{tpu_custom_call.1} parent=5 // pred_check_branch
        %179 = sbr.rel (%p176) target = $region28
      $region27: #{tpu_custom_call.1} parent=5 // pred_region
        %s180 = ssub.s32 %s17, 1
        %s181 = sand.u32 %s44, 1
        %s182 = scalar_lea.sflag [#allocation3], %s181
        %s183 = sand.u32 %s44, 1
        %s184 = smul.addr %s183, 8
        %s185 = scalar_lea.vmem [#allocation2], %s184
        // Predicated region
        $region29: #{tpu_custom_call.1} parent=27 // pred_check
          %p186 = pneg %p57
        $region30: #{tpu_custom_call.1} parent=27 // pred_check_branch
          %188 = sbr.rel (%p186) target = $region32
        $region31: #{tpu_custom_call.1} parent=27 // pred_region
          %189 = dma.done %s182, 128
        $region32: #{tpu_custom_call.1} parent=27 // pred_fallthru
          _
        %s190 = sand.u32 %s72, 1
        %s191 = scalar_lea.sflag [#allocation6], %s190
        %s192 = sand.u32 %s72, 1
        %s193 = smul.addr %s192, 2
        %s194 = scalar_lea.vmem [#allocation5], %s193
        // Predicated region
        $region33: #{tpu_custom_call.1} parent=27 // pred_check
          %p195 = pneg %p85
        $region34: #{tpu_custom_call.1} parent=27 // pred_check_branch
          %197 = sbr.rel (%p195) target = $region36
        $region35: #{tpu_custom_call.1} parent=27 // pred_region
          %198 = dma.done %s191, 32
        $region36: #{tpu_custom_call.1} parent=27 // pred_fallthru
          _
        %s199 = sand.u32 %s44, 1
        %s200 = scalar_lea.sflag [#allocation3], %s199
        %s201 = sand.u32 %s44, 1
        %s202 = smul.addr %s201, 8
        %s203 = scalar_lea.vmem [#allocation2], %s202
        %p204 = pneg %p57
        %p205 = pneg %p54
        %s206 = sand.u32 %s72, 1
        %s207 = scalar_lea.sflag [#allocation6], %s206
        %s208 = sand.u32 %s72, 1
        %s209 = smul.addr %s208, 2
        %s210 = scalar_lea.vmem [#allocation5], %s209
        %p211 = pneg %p85
        %p212 = pneg %p82
        %p213 = pneg %p113
        %p214 = pneg %p110
        %s215 = sand.u32 %s100, 1
        %s216 = scalar_lea.sflag [#allocation4], %s215
        %s217 = sand.u32 %s100, 1
        %s218 = scalar_lea.vmem [#allocation7], %s217
        %s219 = smul.u32 2, %s27
        %s220 = smul.u32 2, %s27
        %v221 = vld [vmem:[%s185] sm:$0xff]
        %v222 = vld [vmem:[%s194] sm:$0x3]
        %vm223 = vcmp.ne.s32.totalorder %v222, 255
        %v225 = vcombine.high %v221, %v221
        %vm227 = vcmask 1043456
        %v228 = vsel %vm227, %v221, -inf
        %v229 = vrot.slane %v228, 4
        %v230 = vmax.f32 %v228, %v229
        %v231 = vrot.slane %v230, 2
        %v232 = vmax.f32 %v230, %v231
        %v233 = vrot.slane %v232, 1
        %v234 = vmax.f32 %v232, %v233
        %v235 = vsel %vm227, %v225, -inf
        %v236 = vrot.slane %v235, 4
        %v237 = vmax.f32 %v235, %v236
        %v238 = vrot.slane %v237, 2
        %v239 = vmax.f32 %v237, %v238
        %v240 = vrot.slane %v239, 1
        %v241 = vmax.f32 %v239, %v240
        %v244 = vcombine.low %v234, %v241
        %v246 = vsub.f32 %v221, %v244
        %v247 = vmul.f32 %v246, 1.442695
        %v248 = vpow.pop %v247
        %v250 = vcombine.high %v248, %v248
        %v252 = vsel %vm227, %v248, 0.0
        %v253 = vrot.slane %v252, 4
        %v254 = vadd.f32 %v252, %v253
        %v255 = vrot.slane %v254, 2
        %v256 = vadd.f32 %v254, %v255
        %v257 = vrot.slane %v256, 1
        %v258 = vadd.f32 %v256, %v257
        %v259 = vsel %vm227, %v250, 0.0
        %v260 = vrot.slane %v259, 4
        %v261 = vadd.f32 %v259, %v260
        %v262 = vrot.slane %v261, 2
        %v263 = vadd.f32 %v261, %v262
        %v264 = vrot.slane %v263, 1
        %v265 = vadd.f32 %v263, %v264
        %v266 = vlog2.pop %v258
        %v267 = vmul.f32 %v266, 0.6931472
        %v268 = vlog2.pop %v265
        %v269 = vmul.f32 %v268, 0.6931472
        %v270 = vadd.f32 %v234, %v267
        %v271 = vadd.f32 %v241, %v269
        %v272 = vlaneseq
        %v273 = vshrl.u32 %v272, 7
        %v274 = vlaneseq
        %v275 = vshrl.u32 %v274, 7
        %v276 = vsub.s32 0, %v275
        %v277 = vrot.slane %v222, %v276
        %v278 = vlaneseq
        %v279 = vshrl.u32 %v278, 7
        %v280 = vsub.s32 1, %v279
        %v281 = vrot.slane %v222, %v280
        %vm282 = vcmp.eq.s32.totalorder %v273, %v277
        %vm283 = vcmp.eq.s32.totalorder %v273, %v281
        %v284 = vsel %vm282, %v221, 0.0
        %v285 = vsel %vm283, %v225, 0.0
        %v286 = vsel %vm227, %v284, 0.0
        %v287 = vrot.slane %v286, 4
        %v288 = vadd.f32 %v286, %v287
        %v289 = vrot.slane %v288, 2
        %v290 = vadd.f32 %v288, %v289
        %v291 = vrot.slane %v290, 1
        %v292 = vadd.f32 %v290, %v291
        %v293 = vsel %vm227, %v285, 0.0
        %v294 = vrot.slane %v293, 4
        %v295 = vadd.f32 %v293, %v294
        %v296 = vrot.slane %v295, 2
        %v297 = vadd.f32 %v295, %v296
        %v298 = vrot.slane %v297, 1
        %v299 = vadd.f32 %v297, %v298
        %v300 = vsub.f32 %v270, %v292
        %v301 = vsub.f32 %v271, %v299
        %v304 = vcombine.low %v300, %v301
        %v306 = vunpack.c.l.s4 1966171168
        %v307 = vunpack.c.0.s8 %v306
        %v308 = vlaneseq
        %v309 = vshrl.u32 %v308, 7
        %v310 = vsub.s32 %v307, %v309
        %v311 = vrot.slane %v304, %v310
        %v313 = vunpack.c.l.s4 1966171168
        %v314 = vunpack.c.0.s8 %v313
        %v315 = vlaneseq
        %v316 = vshrl.u32 %v315, 7
        %v317 = vsub.s32 %v314, %v316
        %v318 = vrot.slane %v311, %v317
        %v320 = vsel %vm223, %v318, 0.0
        %v322 = vlaneseq
        %v323 = vshrl.u32 %v322, 7
        %v324 = vsub.s32 0, %v323
        %v325 = vrot.slane %v320, %v324
        %v326 = vlaneseq
        %v327 = vshrl.u32 %v326, 7
        %v328 = vsub.s32 1, %v327
        %v329 = vrot.slane %v320, %v328
        %vm332 = vcmask 1040384
        %v333 = vsel %vm332, %v325, 0.0
        %v334 = vsel %vm332, %v329, 0.0
        %v335 = vadd.f32 %v333, %v334
        %336 = vadd.xlane.f32.xlu0 %v335
        %v337 = vpop.xlane.xlu0 %336
        %v338 = vrot.slane %v337, 4
        %v339 = vadd.f32 %v337, %v338
        %v340 = vrot.slane %v339, 2
        %v341 = vadd.f32 %v339, %v340
        %v342 = vrot.slane %v341, 1
        %v343 = vadd.f32 %v341, %v342
        %s344 = vtos %v343
        %v345 = vstv %s344
        %346 = vst [vmem:[%s218] sm:$0x1] %v345
        %s347 = sand.u32 %s100, 1
        %s348 = scalar_lea.sflag [#allocation4], %s347
        %s349 = sand.u32 %s100, 1
        %s350 = scalar_lea.vmem [#allocation7], %s349
        // Predicated region
        $region37: #{tpu_custom_call.1} parent=27 // pred_check
          %p351 = pneg %p110
        $region38: #{tpu_custom_call.1} parent=27 // pred_check_branch
          %353 = sbr.rel (%p351) target = $region40
        $region39: #{tpu_custom_call.1} parent=27 // pred_region
          %s355 = ssub.s32 16, 16
          %356 = vsyncadd %s348, %s355
          %s357 = sadd.s32 %s27, %s26
          %s358 = smul.addr %s357, 16
          %s359 = scalar_lea.hbm %s2, %s358
          %s361 = sshll.u32 %s350, 4
          %s362 = int_to_ptr.vmem [resolvable:$true] %s361
          %364 = dma.vmem_to_hbm [thread:$0]  %s362, 16, %s359, %s348
        $region40: #{tpu_custom_call.1} parent=27 // pred_fallthru
          _
      $region28: #{tpu_custom_call.1} parent=5 // pred_fallthru
        _
      %p365 = scmp.le.s32.totalorder 2, %s17
      // Predicated region
      $region41: #{tpu_custom_call.1} parent=5 // pred_check
        %p366 = pneg %p365
      $region42: #{tpu_custom_call.1} parent=5 // pred_check_branch
        %368 = sbr.rel (%p366) target = $region44
      $region43: #{tpu_custom_call.1} parent=5 // pred_region
        %s369 = ssub.s32 %s17, 2
        // Predicated region
        $region45: #{tpu_custom_call.1} parent=43 // pred_check
          %p370 = pneg %p116
        $region46: #{tpu_custom_call.1} parent=43 // pred_check_branch
          %372 = sbr.rel (%p370) target = $region48
        $region47: #{tpu_custom_call.1} parent=43 // pred_region
          %s373 = sand.u32 %s101, 1
          %s374 = scalar_lea.sflag [#allocation4], %s373
          %s375 = sand.u32 %s101, 1
          %s376 = scalar_lea.vmem [#allocation7], %s375
          %377 = dma.done %s374, 16
        $region48: #{tpu_custom_call.1} parent=43 // pred_fallthru
          _
      $region44: #{tpu_custom_call.1} parent=5 // pred_fallthru
        _
    $region6: #{tpu_custom_call.1} parent=1 // loop_footer
      %s21 = sadd.s32 1, %s17
    $region7: #{tpu_custom_call.1} parent=1 // loop_footer_branch
      %16 = sbr.rel target = $region3
    $region8: #{tpu_custom_call.1} parent=1 // loop_exit
      _
    %378 = vsyncpa [#allocation3], 1
    %s379 = scalar_lea.sflag [#allocation3], 1
    %380 = vsyncpa %s379, 1
    %381 = vsyncpa [#allocation6], 1
    %s382 = scalar_lea.sflag [#allocation6], 1
    %383 = vsyncpa %s382, 1
    %384 = vsyncpa [#allocation4], 1
    %s385 = scalar_lea.sflag [#allocation4], 1
    %386 = vsyncpa %s385, 1

</llo_original>
